<compile_context>
chip_gen: v7x
topology: tpu7x:2x2x1
jax: 0.10.0
libtpu: 0.0.40
codegen_flags: <defaults>
</compile_context>

<pallas_src>
import jax
import jax.numpy as jnp
from jax.experimental import pallas as pl
from jax.experimental.pallas import tpu as pltpu


_LANE = 128
_ROW_SLAB_BUDGET = 16 * 1024 * 1024   # double-buffered A row-slab budget (bytes)


def _round_up(x, m):
    return (x + m - 1) // m * m


def _pad2d(a, rows, cols):
    return jnp.pad(a, ((0, rows - a.shape[0]), (0, cols - a.shape[1])))


def _chip_defaults():
    """(fuse threshold on padded N, scoped-VMEM limit in bytes) per TPU gen."""
    try:
        kind = jax.devices()[0].device_kind.lower()
    except Exception:
        kind = ""
    if "v5" in kind or "v6" in kind:
        # 128 MiB physical VMEM, 1 TensorCore -> big fused kernel is best.
        return 2048, 64 * 1024 * 1024
    # v7x (64 MiB VMEM, 2 TCs) and unknown chips: be conservative, hand mid
    # sizes to the row-"parallel" tiled path so megacore can split the work.
    return 1024, 48 * 1024 * 1024


_FUSE_MAX_N, _VMEM_LIMIT = _chip_defaults()


# --------------------------------------------------------------------------
# Kernels
# --------------------------------------------------------------------------

def fused_gcn_kernel(a_ref, x_ref, w1_ref, b1_ref, w2_ref, b2_ref, o_ref):
    """Both GCN layers in one body (small/medium graphs). A_hat read once."""
    a = a_ref[...]                                                     # bf16
    xw1 = jnp.dot(x_ref[...], w1_ref[...],
                  preferred_element_type=jnp.float32)                  # MXU
    h = jnp.maximum(
        jnp.dot(a, xw1.astype(jnp.bfloat16),
                preferred_element_type=jnp.float32) + b1_ref[...], 0.0)
    xw2 = jnp.dot(h.astype(jnp.bfloat16), w2_ref[...],
                  preferred_element_type=jnp.float32)
    o = jnp.maximum(
        jnp.dot(a, xw2.astype(jnp.bfloat16),
                preferred_element_type=jnp.float32) + b2_ref[...], 0.0)
    o_ref[...] = o.astype(o_ref.dtype)


def gcn_layer_kernel(a_ref, x_ref, w_ref, b_ref, o_ref):
    """One row tile of a GCN layer: ReLU((A_rowslab @ X) @ W + b).

    X / W / b have constant index maps (DMAed once, resident in VMEM); only
    the A row slab streams from HBM, so A is read exactly once per layer.
    """
    ax = jnp.dot(a_ref[...], x_ref[...],
                 preferred_element_type=jnp.float32)                   # (tm, F_in)
    out = jnp.dot(ax.astype(jnp.bfloat16), w_ref[...],
                  preferred_element_type=jnp.float32)                  # (tm, F_out)
    o_ref[...] = jnp.maximum(out + b_ref[...], 0.0).astype(o_ref.dtype)


# --------------------------------------------------------------------------
# Wrappers
# --------------------------------------------------------------------------

def gcn_fused(a_p, x_p, w1_p, b1_p, w2_p, b2_p):
    n_pad = a_p.shape[0]
    f_in_p, f_hid_p = w1_p.shape
    f_out_p = w2_p.shape[1]
    flops = (2 * n_pad * f_in_p * f_hid_p + 2 * n_pad * n_pad * f_hid_p
             + 2 * n_pad * f_hid_p * f_out_p + 2 * n_pad * n_pad * f_out_p)
    bytes_accessed = (2 * (n_pad * n_pad + n_pad * f_in_p
                           + f_in_p * f_hid_p + f_hid_p * f_out_p)
                      + 4 * (f_hid_p + f_out_p) + 4 * n_pad * f_out_p)
    return pl.pallas_call(
        fused_gcn_kernel,
        out_shape=jax.ShapeDtypeStruct((n_pad, f_out_p), jnp.float32),
        grid=(1,),
        in_specs=[
            pl.BlockSpec((n_pad, n_pad), lambda i: (0, 0)),      # A_hat
            pl.BlockSpec((n_pad, f_in_p), lambda i: (0, 0)),     # X
            pl.BlockSpec((f_in_p, f_hid_p), lambda i: (0, 0)),   # W1
            pl.BlockSpec((1, f_hid_p), lambda i: (0, 0)),        # b1
            pl.BlockSpec((f_hid_p, f_out_p), lambda i: (0, 0)),  # W2
            pl.BlockSpec((1, f_out_p), lambda i: (0, 0)),        # b2
        ],
        out_specs=pl.BlockSpec((n_pad, f_out_p), lambda i: (0, 0)),
        compiler_params=pltpu.CompilerParams(
            dimension_semantics=("arbitrary",),
            vmem_limit_bytes=_VMEM_LIMIT),
        cost_estimate=pl.CostEstimate(flops=flops, transcendentals=0,
                                      bytes_accessed=bytes_accessed),
    )(a_p, x_p, w1_p, b1_p, w2_p, b2_p)


def gcn_layer_tiled(a_p, x_p, w_p, b_p, tm, out_dtype):
    """One GCN layer (large-graph path): grid over row tiles only."""
    n_pad = a_p.shape[0]
    f_in_p = x_p.shape[1]
    f_out_p = w_p.shape[1]
    flops = 2 * n_pad * n_pad * f_in_p + 2 * n_pad * f_in_p * f_out_p
    bytes_accessed = (2 * n_pad * n_pad + 2 * n_pad * f_in_p
                      + 2 * f_in_p * f_out_p + 4 * f_out_p
                      + n_pad * f_out_p * jnp.dtype(out_dtype).itemsize)
    return pl.pallas_call(
        gcn_layer_kernel,
        out_shape=jax.ShapeDtypeStruct((n_pad, f_out_p), out_dtype),
        grid=(n_pad // tm,),
        in_specs=[
            pl.BlockSpec((tm, n_pad), lambda i: (i, 0)),        # A row slab (streamed)
            pl.BlockSpec((n_pad, f_in_p), lambda i: (0, 0)),    # X (resident)
            pl.BlockSpec((f_in_p, f_out_p), lambda i: (0, 0)),  # W (resident)
            pl.BlockSpec((1, f_out_p), lambda i: (0, 0)),       # b (resident)
        ],
        out_specs=pl.BlockSpec((tm, f_out_p), lambda i: (i, 0)),
        compiler_params=pltpu.CompilerParams(
            dimension_semantics=("parallel",),   # megacore-splittable on v7x
            vmem_limit_bytes=_VMEM_LIMIT),
        cost_estimate=pl.CostEstimate(flops=flops, transcendentals=0,
                                      bytes_accessed=bytes_accessed),
    )(a_p, x_p, w_p, b_p)


# --------------------------------------------------------------------------
# Model glue
# --------------------------------------------------------------------------

def normalized_adjacency_padded(edge_index, num_nodes, n_pad, dtype):
    """Padded dense A_hat = D^-1/2 (A + I) D^-1/2, built directly at (n_pad, n_pad).

    Padding rows/cols have zero degree -> zero rows/cols; under jit the
    scale + cast fuse into a single pass over the N^2 buffer.
    """
    src, dst = edge_index[0], edge_index[1]
    loop = jnp.arange(num_nodes, dtype=edge_index.dtype)
    src = jnp.concatenate([src, loop])
    dst = jnp.concatenate([dst, loop])
    adj = jnp.zeros((n_pad, n_pad), jnp.float32).at[dst, src].add(1.0)
    deg = jnp.sum(adj, axis=1)
    dinv = jnp.where(deg > 0, jax.lax.rsqrt(deg), 0.0)
    return (dinv[:, None] * adj * dinv[None, :]).astype(dtype)


def _node_plan(n):
    """Returns (padded node count, row tile) — row tile is None for fused path."""
    n_pad = _round_up(max(n, 1), _LANE)
    if n_pad <= _FUSE_MAX_N:
        return n_pad, None
    # Tiled path: pad only to 256 so tm in {256, 512} divides evenly
    # (no 512-multiple blowup; worst case +128 rows).
    n_pad = _round_up(n_pad, 256)
    tm = 512 if n_pad % 512 == 0 else 256
    # Keep the double-buffered bf16 A row slab within a fixed VMEM budget.
    while tm > 128 and 2 * tm * n_pad * 2 > _ROW_SLAB_BUDGET:
        tm //= 2
    return n_pad, tm


@jax.jit
def gcn_model(x, edge_index, params):
    """Forward pass of GCNModel: ReLU(GCNConv1) -> ReLU(GCNConv2)."""
    n, f_in = x.shape
    f_hid = params["w1"].shape[1]
    f_out = params["w2"].shape[1]

    n_pad, tm = _node_plan(n)
    f_in_p = _round_up(f_in, _LANE)
    f_hid_p = _round_up(f_hid, _LANE)
    f_out_p = _round_up(f_out, _LANE)

    # lane-dense bf16 operands (zero padding keeps the math exact; biases f32)
    a_p = normalized_adjacency_padded(edge_index, n, n_pad, jnp.bfloat16)
    x_p = _pad2d(x, n_pad, f_in_p).astype(jnp.bfloat16)
    w1_p = _pad2d(params["w1"], f_in_p, f_hid_p).astype(jnp.bfloat16)
    w2_p = _pad2d(params["w2"], f_hid_p, f_out_p).astype(jnp.bfloat16)
    b1_p = jnp.pad(params["b1"], (0, f_hid_p - f_hid)).reshape(1, f_hid_p)
    b2_p = jnp.pad(params["b2"], (0, f_out_p - f_out)).reshape(1, f_out_p)

    if tm is None:
        out_p = gcn_fused(a_p, x_p, w1_p, b1_p, w2_p, b2_p)
    else:
        h_p = gcn_layer_tiled(a_p, x_p, w1_p, b1_p, tm, out_dtype=jnp.bfloat16)
        out_p = gcn_layer_tiled(a_p, h_p, w2_p, b2_p, tm, out_dtype=jnp.float32)

    return out_p[:n, :f_out]


# --------------------------------------------------------------------------
# Test harness
# --------------------------------------------------------------------------

def glorot(key, shape):
    fan_in, fan_out = shape
    limit = jnp.sqrt(6.0 / (fan_in + fan_out))
    return jax.random.uniform(key, shape, jnp.float32, -limit, limit)


def _reference(x, edge_index, params):
    n = x.shape[0]
    a_hat = normalized_adjacency_padded(edge_index, n, n, jnp.float32)
    h = jnp.maximum(a_hat @ (x @ params["w1"]) + params["b1"], 0.0)
    return jnp.maximum(a_hat @ (h @ params["w2"]) + params["b2"], 0.0)


def _ring_edges(num_nodes):
    nodes = jnp.arange(num_nodes, dtype=jnp.int32)
    fwd = jnp.stack([nodes, (nodes + 1) % num_nodes])
    bwd = jnp.stack([(nodes + 1) % num_nodes, nodes])
    return jnp.concatenate([fwd, bwd], axis=1)  # [2, 2*N]


def _check(n, x_key, params, input_dim, output_dim):
    x = jax.random.normal(x_key, (n, input_dim), jnp.float32)
    e = _ring_edges(n)
    out = gcn_model(x, e, params)
    jax.block_until_ready(out)
    ref = _reference(x, e, params)
    assert out.shape == (n, output_dim)
    err = float(jnp.max(jnp.abs(out - ref)))
    assert jnp.allclose(out, ref, atol=5e-2, rtol=5e-2), (n, err)


if __name__ == "__main__":
    key = jax.random.PRNGKey(0)
    k_x1, k_x2, k_x3, k_w1, k_w2 = jax.random.split(key, 5)

    input_dim, hidden_dim, output_dim = 8, 32, 16
    params = {
        "w1": glorot(k_w1, (input_dim, hidden_dim)),
        "b1": jnp.zeros((hidden_dim,), jnp.float32),
        "w2": glorot(k_w2, (hidden_dim, output_dim)),
        "b2": jnp.zeros((output_dim,), jnp.float32),
    }

    # test 1: tiny graph (n_pad=128)    -> fused single-kernel path
    _check(16, k_x1, params, input_dim, output_dim)
    # test 2: mid graph  (n_pad=640)    -> fused path on every generation
    _check(600, k_x2, params, input_dim, output_dim)
    # test 3: large graph (n_pad=2304)  -> row-tiled per-layer path everywhere
    _check(2100, k_x3, params, input_dim, output_dim)

    print("KERNEL_OK")
</pallas_src>

<mosaic_0001>
module attributes {stable_mosaic.version = 11 : i64} {
  func.func private @main(%arg0: i32) attributes {dimension_semantics = [#tpu.dimension_semantics<core_parallel>], iteration_bounds = array<i64: 2>, tpu.core_type = #tpu.core_type<sc_scalar_subcore>, window_params = []} {
    return
  }
}

module attributes {stable_mosaic.version = 11 : i64} {
  func.func private @main(%arg0: i32) attributes {dimension_semantics = [#tpu.dimension_semantics<core_parallel>], iteration_bounds = array<i64: 2>, tpu.core_type = #tpu.core_type<sc_scalar_subcore>, window_params = []} {
    return
  }
}

module attributes {stable_mosaic.version = 11 : i64} {
  func.func @fused_gcn_kernel(%arg0: i32, %arg1: memref<128x128xbf16, #tpu.memory_space<vmem>>, %arg2: memref<128x128xbf16, #tpu.memory_space<vmem>>, %arg3: memref<128x128xbf16, #tpu.memory_space<vmem>>, %arg4: memref<1x128xf32, #tpu.memory_space<vmem>>, %arg5: memref<128x128xbf16, #tpu.memory_space<vmem>>, %arg6: memref<1x128xf32, #tpu.memory_space<vmem>>, %arg7: memref<128x128xf32, #tpu.memory_space<vmem>>) attributes {dimension_semantics = [#tpu.dimension_semantics<arbitrary>], iteration_bounds = array<i64: 1>, scalar_prefetch = 0 : i64, scratch_operands = 0 : i64, tpu.core_type = #tpu.core_type<tc>, window_params = [{pipeline_mode = #tpu.pipeline_mode<synchronous>, transform_indices = @transform_0, window_bounds = array<i64: 128, 128>}, {pipeline_mode = #tpu.pipeline_mode<synchronous>, transform_indices = @transform_1, window_bounds = array<i64: 128, 128>}, {pipeline_mode = #tpu.pipeline_mode<synchronous>, transform_indices = @transform_2, window_bounds = array<i64: 128, 128>}, {pipeline_mode = #tpu.pipeline_mode<synchronous>, transform_indices = @transform_3, window_bounds = array<i64: 1, 128>}, {pipeline_mode = #tpu.pipeline_mode<synchronous>, transform_indices = @transform_4, window_bounds = array<i64: 128, 128>}, {pipeline_mode = #tpu.pipeline_mode<synchronous>, transform_indices = @transform_5, window_bounds = array<i64: 1, 128>}, {pipeline_mode = #tpu.pipeline_mode<synchronous>, transform_indices = @transform_6, window_bounds = array<i64: 128, 128>}]} {
    %c0 = arith.constant 0 : index
    %c0_0 = arith.constant 0 : index
    %0 = vector.load %arg1[%c0, %c0_0] : memref<128x128xbf16, #tpu.memory_space<vmem>>, vector<128x128xbf16>
    %c0_1 = arith.constant 0 : index
    %c0_2 = arith.constant 0 : index
    %1 = vector.load %arg2[%c0_1, %c0_2] : memref<128x128xbf16, #tpu.memory_space<vmem>>, vector<128x128xbf16>
    %c0_3 = arith.constant 0 : index
    %c0_4 = arith.constant 0 : index
    %2 = vector.load %arg3[%c0_3, %c0_4] : memref<128x128xbf16, #tpu.memory_space<vmem>>, vector<128x128xbf16>
    %cst = arith.constant dense<0.000000e+00> : vector<128x128xf32>
    %3 = tpu.matmul %1, %2, %cst {dimension_numbers = #tpu.dot_dimension_numbers<[1], [0], [0], [1], [0, 0, 1, 1], [], []>} : vector<128x128xbf16>, vector<128x128xbf16>, vector<128x128xf32> -> vector<128x128xf32>
    %4 = arith.truncf %3 : vector<128x128xf32> to vector<128x128xbf16>
    %cst_5 = arith.constant dense<0.000000e+00> : vector<128x128xf32>
    %5 = tpu.matmul %0, %4, %cst_5 {dimension_numbers = #tpu.dot_dimension_numbers<[1], [0], [0], [1], [0, 0, 1, 1], [], []>} : vector<128x128xbf16>, vector<128x128xbf16>, vector<128x128xf32> -> vector<128x128xf32>
    %c0_6 = arith.constant 0 : index
    %c0_7 = arith.constant 0 : index
    %6 = vector.load %arg4[%c0_6, %c0_7] : memref<1x128xf32, #tpu.memory_space<vmem>>, vector<1x128xf32>
    %7 = vector.broadcast %6 : vector<1x128xf32> to vector<128x128xf32>
    %8 = arith.addf %5, %7 : vector<128x128xf32>
    %cst_8 = arith.constant 0.000000e+00 : f32
    %9 = vector.broadcast %cst_8 : f32 to vector<128x128xf32>
    %10 = arith.maximumf %8, %9 : vector<128x128xf32>
    %11 = arith.truncf %10 : vector<128x128xf32> to vector<128x128xbf16>
    %c0_9 = arith.constant 0 : index
    %c0_10 = arith.constant 0 : index
    %12 = vector.load %arg5[%c0_9, %c0_10] : memref<128x128xbf16, #tpu.memory_space<vmem>>, vector<128x128xbf16>
    %cst_11 = arith.constant dense<0.000000e+00> : vector<128x128xf32>
    %13 = tpu.matmul %11, %12, %cst_11 {dimension_numbers = #tpu.dot_dimension_numbers<[1], [0], [0], [1], [0, 0, 1, 1], [], []>} : vector<128x128xbf16>, vector<128x128xbf16>, vector<128x128xf32> -> vector<128x128xf32>
    %14 = arith.truncf %13 : vector<128x128xf32> to vector<128x128xbf16>
    %cst_12 = arith.constant dense<0.000000e+00> : vector<128x128xf32>
    %15 = tpu.matmul %0, %14, %cst_12 {dimension_numbers = #tpu.dot_dimension_numbers<[1], [0], [0], [1], [0, 0, 1, 1], [], []>} : vector<128x128xbf16>, vector<128x128xbf16>, vector<128x128xf32> -> vector<128x128xf32>
    %c0_13 = arith.constant 0 : index
    %c0_14 = arith.constant 0 : index
    %16 = vector.load %arg6[%c0_13, %c0_14] : memref<1x128xf32, #tpu.memory_space<vmem>>, vector<1x128xf32>
    %17 = vector.broadcast %16 : vector<1x128xf32> to vector<128x128xf32>
    %18 = arith.addf %15, %17 : vector<128x128xf32>
    %cst_15 = arith.constant 0.000000e+00 : f32
    %19 = vector.broadcast %cst_15 : f32 to vector<128x128xf32>
    %20 = arith.maximumf %18, %19 : vector<128x128xf32>
    %c0_16 = arith.constant 0 : index
    %c0_17 = arith.constant 0 : index
    %21 = vector.load %arg7[%c0_16, %c0_17] : memref<128x128xf32, #tpu.memory_space<vmem>>, vector<128x128xf32>
    tpu.vector_store %arg7[%c0_16, %c0_17], %20 {strides = array<i32>} : memref<128x128xf32, #tpu.memory_space<vmem>>, vector<128x128xf32>,
    return
  }
  func.func @transform_0(%arg0: i32) -> (i32, i32) {
    %c0_i32 = arith.constant 0 : i32
    %c0_i32_0 = arith.constant 0 : i32
    %c0_i32_1 = arith.constant 0 : i32
    return %c0_i32, %c0_i32_0 : i32, i32
  }
  func.func @transform_1(%arg0: i32) -> (i32, i32) {
    %c0_i32 = arith.constant 0 : i32
    %c0_i32_0 = arith.constant 0 : i32
    %c0_i32_1 = arith.constant 0 : i32
    return %c0_i32, %c0_i32_0 : i32, i32
  }
  func.func @transform_2(%arg0: i32) -> (i32, i32) {
    %c0_i32 = arith.constant 0 : i32
    %c0_i32_0 = arith.constant 0 : i32
    %c0_i32_1 = arith.constant 0 : i32
    return %c0_i32, %c0_i32_0 : i32, i32
  }
  func.func @transform_3(%arg0: i32) -> (i32, i32) {
    %c0_i32 = arith.constant 0 : i32
    %c0_i32_0 = arith.constant 0 : i32
    %c0_i32_1 = arith.constant 0 : i32
    return %c0_i32, %c0_i32_0 : i32, i32
  }
  func.func @transform_4(%arg0: i32) -> (i32, i32) {
    %c0_i32 = arith.constant 0 : i32
    %c0_i32_0 = arith.constant 0 : i32
    %c0_i32_1 = arith.constant 0 : i32
    return %c0_i32, %c0_i32_0 : i32, i32
  }
  func.func @transform_5(%arg0: i32) -> (i32, i32) {
    %c0_i32 = arith.constant 0 : i32
    %c0_i32_0 = arith.constant 0 : i32
    %c0_i32_1 = arith.constant 0 : i32
    return %c0_i32, %c0_i32_0 : i32, i32
  }
  func.func @transform_6(%arg0: i32) -> (i32, i32) {
    %c0_i32 = arith.constant 0 : i32
    %c0_i32_0 = arith.constant 0 : i32
    %c0_i32_1 = arith.constant 0 : i32
    return %c0_i32, %c0_i32_0 : i32, i32
  }
}

</mosaic_0001>

<llo_original>
// kernel: gcn_model.1
$region0: #{gcn_model.1}
  #allocation0 [shape = 'u32[]', space=smem, size = 0x4, offset = 0x4, fixed_abs, tag = 'smem constant byte address 0x4 - core index']
  #allocation1 [shape = 'u32[144,128]{1,0:T(1,128)}', space=vmem, size = 0x12000, scoped, tag = 'internal scratch']
  %s0 = inlined_call_operand.vmem [shape: bf16[128,128], index: 0, kind: input, shape index: {}]
  %s1 = inlined_call_operand.vmem [shape: bf16[128,128], index: 1, kind: input, shape index: {}]
  %s2 = inlined_call_operand.vmem [shape: bf16[128,128], index: 2, kind: input, shape index: {}]
  %s3 = inlined_call_operand.vmem [shape: f32[1,128], index: 3, kind: input, shape index: {}]
  %s4 = inlined_call_operand.vmem [shape: bf16[128,128], index: 4, kind: input, shape index: {}]
  %s5 = inlined_call_operand.vmem [shape: f32[1,128], index: 5, kind: input, shape index: {}]
  %s6 = inlined_call_operand.vmem [shape: f32[128,128], index: 6, kind: output, shape index: {}]
  %s7 = sld [smem:[#allocation0]]
  $region34: #{gcn_model.1} parent=0
    _
  %s9 = ssub.s32 1, %s7
  %s10 = scalar_select 0, %s9, %s7
  // Predicated region
  $region2: #{gcn_model.1} parent=0 // pred_check
    _
  $region3: #{gcn_model.1} parent=0 // pred_check_branch
    %12 = sbr.rel (0) target = $region5
  $region4: #{gcn_model.1} parent=0 // pred_region
    _
  $region5: #{gcn_model.1} parent=0 // pred_fallthru
    _
  // Predicated region
  $region6: #{gcn_model.1} parent=0 // pred_check
    _
  $region7: #{gcn_model.1} parent=0 // pred_check_branch
    %14 = sbr.rel (0) target = $region9
  $region8: #{gcn_model.1} parent=0 // pred_region
    _
  $region9: #{gcn_model.1} parent=0 // pred_fallthru
    _
  // Predicated region
  $region10: #{gcn_model.1} parent=0 // pred_check
    _
  $region11: #{gcn_model.1} parent=0 // pred_check_branch
    %16 = sbr.rel (0) target = $region13
  $region12: #{gcn_model.1} parent=0 // pred_region
    _
  $region13: #{gcn_model.1} parent=0 // pred_fallthru
    _
  // Predicated region
  $region14: #{gcn_model.1} parent=0 // pred_check
    _
  $region15: #{gcn_model.1} parent=0 // pred_check_branch
    %18 = sbr.rel (0) target = $region17
  $region16: #{gcn_model.1} parent=0 // pred_region
    _
  $region17: #{gcn_model.1} parent=0 // pred_fallthru
    _
  // Predicated region
  $region18: #{gcn_model.1} parent=0 // pred_check
    _
  $region19: #{gcn_model.1} parent=0 // pred_check_branch
    %20 = sbr.rel (0) target = $region21
  $region20: #{gcn_model.1} parent=0 // pred_region
    _
  $region21: #{gcn_model.1} parent=0 // pred_fallthru
    _
  // Predicated region
  $region22: #{gcn_model.1} parent=0 // pred_check
    _
  $region23: #{gcn_model.1} parent=0 // pred_check_branch
    %22 = sbr.rel (0) target = $region25
  $region24: #{gcn_model.1} parent=0 // pred_region
    _
  $region25: #{gcn_model.1} parent=0 // pred_fallthru
    _
  %v24 = vld [vmem:[%s0] sm:$0xf]
  %v25 = vld [vmem:[%s0 + $0x4] sm:$0xf]
  %v26 = vld [vmem:[%s0 + $0x8] sm:$0xf]
  %v27 = vld [vmem:[%s0 + $0xc] sm:$0xf]
  %v28 = vld [vmem:[%s0 + $0x10] sm:$0xf]
  %v29 = vld [vmem:[%s0 + $0x14] sm:$0xf]
  %v30 = vld [vmem:[%s0 + $0x18] sm:$0xf]
  %v31 = vld [vmem:[%s0 + $0x1c] sm:$0xf]
  %v32 = vld [vmem:[%s0 + $0x20] sm:$0xf]
  %v33 = vld [vmem:[%s0 + $0x24] sm:$0xf]
  %v34 = vld [vmem:[%s0 + $0x28] sm:$0xf]
  %v35 = vld [vmem:[%s0 + $0x2c] sm:$0xf]
  %v36 = vld [vmem:[%s0 + $0x30] sm:$0xf]
  %v37 = vld [vmem:[%s0 + $0x34] sm:$0xf]
  %v38 = vld [vmem:[%s0 + $0x38] sm:$0xf]
  %v39 = vld [vmem:[%s0 + $0x3c] sm:$0xf]
  %v40 = vld [vmem:[%s1] sm:$0xf]
  %v41 = vld [vmem:[%s1 + $0x4] sm:$0xf]
  %v42 = vld [vmem:[%s1 + $0x8] sm:$0xf]
  %v43 = vld [vmem:[%s1 + $0xc] sm:$0xf]
  %v44 = vld [vmem:[%s1 + $0x10] sm:$0xf]
  %v45 = vld [vmem:[%s1 + $0x14] sm:$0xf]
  %v46 = vld [vmem:[%s1 + $0x18] sm:$0xf]
  %v47 = vld [vmem:[%s1 + $0x1c] sm:$0xf]
  %v48 = vld [vmem:[%s1 + $0x20] sm:$0xf]
  %v49 = vld [vmem:[%s1 + $0x24] sm:$0xf]
  %v50 = vld [vmem:[%s1 + $0x28] sm:$0xf]
  %v51 = vld [vmem:[%s1 + $0x2c] sm:$0xf]
  %v52 = vld [vmem:[%s1 + $0x30] sm:$0xf]
  %v53 = vld [vmem:[%s1 + $0x34] sm:$0xf]
  %v54 = vld [vmem:[%s1 + $0x38] sm:$0xf]
  %v55 = vld [vmem:[%s1 + $0x3c] sm:$0xf]
  %v56 = vld [vmem:[%s2] sm:$0xf]
  %v57 = vld [vmem:[%s2 + $0x4] sm:$0xf]
  %v58 = vld [vmem:[%s2 + $0x8] sm:$0xf]
  %v59 = vld [vmem:[%s2 + $0xc] sm:$0xf]
  %v60 = vld [vmem:[%s2 + $0x10] sm:$0xf]
  %v61 = vld [vmem:[%s2 + $0x14] sm:$0xf]
  %v62 = vld [vmem:[%s2 + $0x18] sm:$0xf]
  %v63 = vld [vmem:[%s2 + $0x1c] sm:$0xf]
  %v64 = vld [vmem:[%s2 + $0x20] sm:$0xf]
  %v65 = vld [vmem:[%s2 + $0x24] sm:$0xf]
  %v66 = vld [vmem:[%s2 + $0x28] sm:$0xf]
  %v67 = vld [vmem:[%s2 + $0x2c] sm:$0xf]
  %v68 = vld [vmem:[%s2 + $0x30] sm:$0xf]
  %v69 = vld [vmem:[%s2 + $0x34] sm:$0xf]
  %v70 = vld [vmem:[%s2 + $0x38] sm:$0xf]
  %v71 = vld [vmem:[%s2 + $0x3c] sm:$0xf]
  %v88 = vunpack.c.l.b16 %v40
  %v89 = vunpack.c.l.b16 %v41
  %v90 = vunpack.c.l.b16 %v42
  %v91 = vunpack.c.l.b16 %v43
  %v92 = vunpack.c.l.b16 %v44
  %v93 = vunpack.c.l.b16 %v45
  %v94 = vunpack.c.l.b16 %v46
  %v95 = vunpack.c.l.b16 %v47
  %v96 = vunpack.c.l.b16 %v48
  %v97 = vunpack.c.l.b16 %v49
  %v98 = vunpack.c.l.b16 %v50
  %v99 = vunpack.c.l.b16 %v51
  %v100 = vunpack.c.l.b16 %v52
  %v101 = vunpack.c.l.b16 %v53
  %v102 = vunpack.c.l.b16 %v54
  %v103 = vunpack.c.l.b16 %v55
  %v104 = vpack.c.b16 %v89, %v88
  %v105 = vpack.c.b16 %v91, %v90
  %v106 = vpack.c.b16 %v93, %v92
  %v107 = vpack.c.b16 %v95, %v94
  %v108 = vpack.c.b16 %v97, %v96
  %v109 = vpack.c.b16 %v99, %v98
  %v110 = vpack.c.b16 %v101, %v100
  %v111 = vpack.c.b16 %v103, %v102
  %v136 = vunpack.c.l.b16 %v56
  %v137 = vunpack.c.l.b16 %v57
  %v138 = vunpack.c.l.b16 %v58
  %v139 = vunpack.c.l.b16 %v59
  %v140 = vunpack.c.l.b16 %v60
  %v141 = vunpack.c.l.b16 %v61
  %v142 = vunpack.c.l.b16 %v62
  %v143 = vunpack.c.l.b16 %v63
  %v144 = vunpack.c.l.b16 %v64
  %v145 = vunpack.c.l.b16 %v65
  %v146 = vunpack.c.l.b16 %v66
  %v147 = vunpack.c.l.b16 %v67
  %v148 = vunpack.c.l.b16 %v68
  %v149 = vunpack.c.l.b16 %v69
  %v150 = vunpack.c.l.b16 %v70
  %v151 = vunpack.c.l.b16 %v71
  %v152 = vpack.c.b16 %v137, %v136
  %v153 = vpack.c.b16 %v139, %v138
  %v154 = vpack.c.b16 %v141, %v140
  %v155 = vpack.c.b16 %v143, %v142
  %v156 = vpack.c.b16 %v145, %v144
  %v157 = vpack.c.b16 %v147, %v146
  %v158 = vpack.c.b16 %v149, %v148
  %v159 = vpack.c.b16 %v151, %v150
  %168 = vmatprep.subr.bf16.mxu0 0
  %169 = vmatpush1.bf16.msra.mxu0 %v152
  %170 = vmatprep.subr.bf16.mxu0 0
  %171 = vmatpush1.bf16.msra.mxu0 %v153
  %172 = vmatprep.subr.bf16.mxu0 0
  %173 = vmatpush1.bf16.msra.mxu0 %v154
  %174 = vmatprep.subr.bf16.mxu0 0
  %175 = vmatpush1.bf16.msra.mxu0 %v155
  %176 = vmatprep.subr.bf16.mxu0 0
  %177 = vmatpush1.bf16.msra.mxu0 %v156
  %178 = vmatprep.subr.bf16.mxu0 0
  %179 = vmatpush1.bf16.msra.mxu0 %v157
  %180 = vmatprep.subr.bf16.mxu0 0
  %181 = vmatpush1.bf16.msra.mxu0 %v158
  %182 = vmatprep.subr.bf16.mxu0 0
  %183 = vmatpush1.bf16.msra.mxu0 %v159
  %184 = vmatprep.subr.bf16.mxu0 0
  %185 = vmatpush1.bf16.msra.mxu0 0
  %186 = vmatprep.subr.bf16.mxu0 0
  %187 = vmatpush1.bf16.msra.mxu0 0
  %188 = vmatprep.subr.bf16.mxu0 0
  %189 = vmatpush1.bf16.msra.mxu0 0
  %190 = vmatprep.subr.bf16.mxu0 0
  %191 = vmatpush1.bf16.msra.mxu0 0
  %192 = vmatprep.subr.bf16.mxu0 0
  %193 = vmatpush1.bf16.msra.mxu0 0
  %194 = vmatprep.subr.bf16.mxu0 0
  %195 = vmatpush1.bf16.msra.mxu0 0
  %196 = vmatprep.subr.bf16.mxu0 0
  %197 = vmatpush1.bf16.msra.mxu0 0
  %198 = vmatprep.subr.bf16.mxu0 0
  %199 = vmatpush1.bf16.msra.mxu0 0
  %200 = vmatprep.mubr.bf16.mxu0 0
  %201 = vmatmul.mubr.bf16.gmra.mrb[0].mxu0 %v104
  %v202 = vpop.f32.mrb[0].mxu0
  %v203 = vadd.f32 0.0, %v202
  %v204 = vpop.f32.mrb[0].mxu0
  %v205 = vpop.f32.mrb[0].mxu0
  %v206 = vadd.f32 0.0, %v205
  %v207 = vpop.f32.mrb[0].mxu0
  %208 = vmatprep.mubr.bf16.mxu0 0
  %209 = vmatmul.mubr.bf16.gmra.mrb[0].mxu0 %v105
  %v210 = vpop.f32.mrb[0].mxu0
  %v211 = vadd.f32 0.0, %v210
  %v212 = vpop.f32.mrb[0].mxu0
  %v213 = vpop.f32.mrb[0].mxu0
  %v214 = vadd.f32 0.0, %v213
  %v215 = vpop.f32.mrb[0].mxu0
  %216 = vmatprep.mubr.bf16.mxu0 0
  %217 = vmatmul.mubr.bf16.gmra.mrb[0].mxu0 %v106
  %v218 = vpop.f32.mrb[0].mxu0
  %v219 = vadd.f32 0.0, %v218
  %v220 = vpop.f32.mrb[0].mxu0
  %v221 = vpop.f32.mrb[0].mxu0
  %v222 = vadd.f32 0.0, %v221
  %v223 = vpop.f32.mrb[0].mxu0
  %224 = vmatprep.mubr.bf16.mxu0 0
  %225 = vmatmul.mubr.bf16.gmra.mrb[0].mxu0 %v107
  %v226 = vpop.f32.mrb[0].mxu0
  %v227 = vadd.f32 0.0, %v226
  %v228 = vpop.f32.mrb[0].mxu0
  %v229 = vpop.f32.mrb[0].mxu0
  %v230 = vadd.f32 0.0, %v229
  %v231 = vpop.f32.mrb[0].mxu0
  %232 = vmatprep.mubr.bf16.mxu0 0
  %233 = vmatmul.mubr.bf16.gmra.mrb[0].mxu0 %v108
  %v234 = vpop.f32.mrb[0].mxu0
  %v235 = vadd.f32 0.0, %v234
  %v236 = vpop.f32.mrb[0].mxu0
  %v237 = vpop.f32.mrb[0].mxu0
  %v238 = vadd.f32 0.0, %v237
  %v239 = vpop.f32.mrb[0].mxu0
  %240 = vmatprep.mubr.bf16.mxu0 0
  %241 = vmatmul.mubr.bf16.gmra.mrb[0].mxu0 %v109
  %v242 = vpop.f32.mrb[0].mxu0
  %v243 = vadd.f32 0.0, %v242
  %v244 = vpop.f32.mrb[0].mxu0
  %v245 = vpop.f32.mrb[0].mxu0
  %v246 = vadd.f32 0.0, %v245
  %v247 = vpop.f32.mrb[0].mxu0
  %248 = vmatprep.mubr.bf16.mxu0 0
  %249 = vmatmul.mubr.bf16.gmra.mrb[0].mxu0 %v110
  %v250 = vpop.f32.mrb[0].mxu0
  %v251 = vadd.f32 0.0, %v250
  %v252 = vpop.f32.mrb[0].mxu0
  %v253 = vpop.f32.mrb[0].mxu0
  %v254 = vadd.f32 0.0, %v253
  %v255 = vpop.f32.mrb[0].mxu0
  %256 = vmatprep.mubr.bf16.mxu0 0
  %257 = vmatmul.mubr.bf16.gmra.mrb[0].mxu0 %v111
  %v258 = vpop.f32.mrb[0].mxu0
  %v259 = vadd.f32 0.0, %v258
  %v260 = vpop.f32.mrb[0].mxu0
  %v261 = vpop.f32.mrb[0].mxu0
  %v262 = vadd.f32 0.0, %v261
  %v263 = vpop.f32.mrb[0].mxu0
  %264 = vdwg.mxu0
  %v265 = vpack.c.bf16 %v206, %v203
  %v266 = vpack.c.bf16 %v214, %v211
  %v267 = vpack.c.bf16 %v222, %v219
  %v268 = vpack.c.bf16 %v230, %v227
  %v269 = vpack.c.bf16 %v238, %v235
  %v270 = vpack.c.bf16 %v246, %v243
  %v271 = vpack.c.bf16 %v254, %v251
  %v272 = vpack.c.bf16 %v262, %v259
  %v273 = vld [vmem:[%s3] sm:$0x1]
  %v275 = vlaneseq
  %v276 = vshrl.u32 %v275, 7
  %v277 = vsub.s32 0, %v276
  %v278 = vrot.slane %v273, %v277
  %v296 = vunpack.c.l.b16 %v24
  %v297 = vunpack.c.l.b16 %v25
  %v298 = vunpack.c.l.b16 %v26
  %v299 = vunpack.c.l.b16 %v27
  %v300 = vunpack.c.l.b16 %v28
  %v301 = vunpack.c.l.b16 %v29
  %v302 = vunpack.c.l.b16 %v30
  %v303 = vunpack.c.l.b16 %v31
  %v304 = vunpack.c.l.b16 %v32
  %v305 = vunpack.c.l.b16 %v33
  %v306 = vunpack.c.l.b16 %v34
  %v307 = vunpack.c.l.b16 %v35
  %v308 = vunpack.c.l.b16 %v36
  %v309 = vunpack.c.l.b16 %v37
  %v310 = vunpack.c.l.b16 %v38
  %v311 = vunpack.c.l.b16 %v39
  %v312 = vpack.c.b16 %v297, %v296
  %v313 = vpack.c.b16 %v299, %v298
  %v314 = vpack.c.b16 %v301, %v300
  %v315 = vpack.c.b16 %v303, %v302
  %v316 = vpack.c.b16 %v305, %v304
  %v317 = vpack.c.b16 %v307, %v306
  %v318 = vpack.c.b16 %v309, %v308
  %v319 = vpack.c.b16 %v311, %v310
  %328 = vmatprep.subr.bf16.mxu0 0
  %329 = vmatpush1.bf16.msra.mxu0 %v265
  %330 = vmatprep.subr.bf16.mxu0 0
  %331 = vmatpush1.bf16.msra.mxu0 %v266
  %332 = vmatprep.subr.bf16.mxu0 0
  %333 = vmatpush1.bf16.msra.mxu0 %v267
  %334 = vmatprep.subr.bf16.mxu0 0
  %335 = vmatpush1.bf16.msra.mxu0 %v268
  %336 = vmatprep.subr.bf16.mxu0 0
  %337 = vmatpush1.bf16.msra.mxu0 %v269
  %338 = vmatprep.subr.bf16.mxu0 0
  %339 = vmatpush1.bf16.msra.mxu0 %v270
  %340 = vmatprep.subr.bf16.mxu0 0
  %341 = vmatpush1.bf16.msra.mxu0 %v271
  %342 = vmatprep.subr.bf16.mxu0 0
  %343 = vmatpush1.bf16.msra.mxu0 %v272
  %344 = vmatprep.subr.bf16.mxu0 0
  %345 = vmatpush1.bf16.msra.mxu0 0
  %346 = vmatprep.subr.bf16.mxu0 0
  %347 = vmatpush1.bf16.msra.mxu0 0
  %348 = vmatprep.subr.bf16.mxu0 0
  %349 = vmatpush1.bf16.msra.mxu0 0
  %350 = vmatprep.subr.bf16.mxu0 0
  %351 = vmatpush1.bf16.msra.mxu0 0
  %352 = vmatprep.subr.bf16.mxu0 0
  %353 = vmatpush1.bf16.msra.mxu0 0
  %354 = vmatprep.subr.bf16.mxu0 0
  %355 = vmatpush1.bf16.msra.mxu0 0
  %356 = vmatprep.subr.bf16.mxu0 0
  %357 = vmatpush1.bf16.msra.mxu0 0
  %358 = vmatprep.subr.bf16.mxu0 0
  %359 = vmatpush1.bf16.msra.mxu0 0
  %360 = vmatprep.mubr.bf16.mxu0 0
  %361 = vmatmul.mubr.bf16.gmra.mrb[0].mxu0 %v312
  %v362 = vpop.f32.mrb[0].mxu0
  %v363 = vadd.f32 %v278, %v362
  %v364 = vpop.f32.mrb[0].mxu0
  %v365 = vpop.f32.mrb[0].mxu0
  %v366 = vadd.f32 %v278, %v365
  %v367 = vpop.f32.mrb[0].mxu0
  %368 = vmatprep.mubr.bf16.mxu0 0
  %369 = vmatmul.mubr.bf16.gmra.mrb[0].mxu0 %v313
  %v370 = vpop.f32.mrb[0].mxu0
  %v371 = vadd.f32 %v278, %v370
  %v372 = vpop.f32.mrb[0].mxu0
  %v373 = vpop.f32.mrb[0].mxu0
  %v374 = vadd.f32 %v278, %v373
  %v375 = vpop.f32.mrb[0].mxu0
  %376 = vmatprep.mubr.bf16.mxu0 0
  %377 = vmatmul.mubr.bf16.gmra.mrb[0].mxu0 %v314
  %v378 = vpop.f32.mrb[0].mxu0
  %v379 = vadd.f32 %v278, %v378
  %v380 = vpop.f32.mrb[0].mxu0
  %v381 = vpop.f32.mrb[0].mxu0
  %v382 = vadd.f32 %v278, %v381
  %v383 = vpop.f32.mrb[0].mxu0
  %384 = vmatprep.mubr.bf16.mxu0 0
  %385 = vmatmul.mubr.bf16.gmra.mrb[0].mxu0 %v315
  %v386 = vpop.f32.mrb[0].mxu0
  %v387 = vadd.f32 %v278, %v386
  %v388 = vpop.f32.mrb[0].mxu0
  %v389 = vpop.f32.mrb[0].mxu0
  %v390 = vadd.f32 %v278, %v389
  %v391 = vpop.f32.mrb[0].mxu0
  %392 = vmatprep.mubr.bf16.mxu0 0
  %393 = vmatmul.mubr.bf16.gmra.mrb[0].mxu0 %v316
  %v394 = vpop.f32.mrb[0].mxu0
  %v395 = vadd.f32 %v278, %v394
  %v396 = vpop.f32.mrb[0].mxu0
  %v397 = vpop.f32.mrb[0].mxu0
  %v398 = vadd.f32 %v278, %v397
  %v399 = vpop.f32.mrb[0].mxu0
  %400 = vmatprep.mubr.bf16.mxu0 0
  %401 = vmatmul.mubr.bf16.gmra.mrb[0].mxu0 %v317
  %v402 = vpop.f32.mrb[0].mxu0
  %v403 = vadd.f32 %v278, %v402
  %v404 = vpop.f32.mrb[0].mxu0
  %v405 = vpop.f32.mrb[0].mxu0
  %v406 = vadd.f32 %v278, %v405
  %v407 = vpop.f32.mrb[0].mxu0
  %408 = vmatprep.mubr.bf16.mxu0 0
  %409 = vmatmul.mubr.bf16.gmra.mrb[0].mxu0 %v318
  %v410 = vpop.f32.mrb[0].mxu0
  %v411 = vadd.f32 %v278, %v410
  %v412 = vpop.f32.mrb[0].mxu0
  %v413 = vpop.f32.mrb[0].mxu0
  %v414 = vadd.f32 %v278, %v413
  %v415 = vpop.f32.mrb[0].mxu0
  %416 = vmatprep.mubr.bf16.mxu0 0
  %417 = vmatmul.mubr.bf16.gmra.mrb[0].mxu0 %v319
  %v418 = vpop.f32.mrb[0].mxu0
  %v419 = vadd.f32 %v278, %v418
  %v420 = vpop.f32.mrb[0].mxu0
  %v421 = vpop.f32.mrb[0].mxu0
  %v422 = vadd.f32 %v278, %v421
  %v423 = vpop.f32.mrb[0].mxu0
  %424 = vdwg.mxu0
  %v425 = vmax.f32 %v363, 0.0
  %v426 = vmax.f32 %v366, 0.0
  %v427 = vmax.f32 %v371, 0.0
  %v428 = vmax.f32 %v374, 0.0
  %v429 = vmax.f32 %v379, 0.0
  %v430 = vmax.f32 %v382, 0.0
  %v431 = vmax.f32 %v387, 0.0
  %v432 = vmax.f32 %v390, 0.0
  %v433 = vmax.f32 %v395, 0.0
  %v434 = vmax.f32 %v398, 0.0
  %v435 = vmax.f32 %v403, 0.0
  %v436 = vmax.f32 %v406, 0.0
  %v437 = vmax.f32 %v411, 0.0
  %v438 = vmax.f32 %v414, 0.0
  %v439 = vmax.f32 %v419, 0.0
  %v440 = vmax.f32 %v422, 0.0
  %v441 = vpack.c.bf16 %v426, %v425
  %v442 = vpack.c.bf16 %v428, %v427
  %v443 = vpack.c.bf16 %v430, %v429
  %v444 = vpack.c.bf16 %v432, %v431
  %v445 = vpack.c.bf16 %v434, %v433
  %v446 = vpack.c.bf16 %v436, %v435
  %v447 = vpack.c.bf16 %v438, %v437
  %v448 = vpack.c.bf16 %v440, %v439
  %v449 = vld [vmem:[%s4] sm:$0xf]
  %v450 = vld [vmem:[%s4 + $0x4] sm:$0xf]
  %v451 = vld [vmem:[%s4 + $0x8] sm:$0xf]
  %v452 = vld [vmem:[%s4 + $0xc] sm:$0xf]
  %v453 = vld [vmem:[%s4 + $0x10] sm:$0xf]
  %v454 = vld [vmem:[%s4 + $0x14] sm:$0xf]
  %v455 = vld [vmem:[%s4 + $0x18] sm:$0xf]
  %v456 = vld [vmem:[%s4 + $0x1c] sm:$0xf]
  %v457 = vld [vmem:[%s4 + $0x20] sm:$0xf]
  %v458 = vld [vmem:[%s4 + $0x24] sm:$0xf]
  %v459 = vld [vmem:[%s4 + $0x28] sm:$0xf]
  %v460 = vld [vmem:[%s4 + $0x2c] sm:$0xf]
  %v461 = vld [vmem:[%s4 + $0x30] sm:$0xf]
  %v462 = vld [vmem:[%s4 + $0x34] sm:$0xf]
  %v463 = vld [vmem:[%s4 + $0x38] sm:$0xf]
  %v464 = vld [vmem:[%s4 + $0x3c] sm:$0xf]
  %v481 = vunpack.c.l.b16 %v449
  %v482 = vunpack.c.l.b16 %v450
  %v483 = vunpack.c.l.b16 %v451
  %v484 = vunpack.c.l.b16 %v452
  %v485 = vunpack.c.l.b16 %v453
  %v486 = vunpack.c.l.b16 %v454
  %v487 = vunpack.c.l.b16 %v455
  %v488 = vunpack.c.l.b16 %v456
  %v489 = vunpack.c.l.b16 %v457
  %v490 = vunpack.c.l.b16 %v458
  %v491 = vunpack.c.l.b16 %v459
  %v492 = vunpack.c.l.b16 %v460
  %v493 = vunpack.c.l.b16 %v461
  %v494 = vunpack.c.l.b16 %v462
  %v495 = vunpack.c.l.b16 %v463
  %v496 = vunpack.c.l.b16 %v464
  %v497 = vpack.c.b16 %v482, %v481
  %v498 = vpack.c.b16 %v484, %v483
  %v499 = vpack.c.b16 %v486, %v485
  %v500 = vpack.c.b16 %v488, %v487
  %v501 = vpack.c.b16 %v490, %v489
  %v502 = vpack.c.b16 %v492, %v491
  %v503 = vpack.c.b16 %v494, %v493
  %v504 = vpack.c.b16 %v496, %v495
  %513 = vmatprep.subr.bf16.mxu0 0
  %514 = vmatpush1.bf16.msra.mxu0 %v497
  %515 = vmatprep.subr.bf16.mxu0 0
  %516 = vmatpush1.bf16.msra.mxu0 %v498
  %517 = vmatprep.subr.bf16.mxu0 0
  %518 = vmatpush1.bf16.msra.mxu0 %v499
  %519 = vmatprep.subr.bf16.mxu0 0
  %520 = vmatpush1.bf16.msra.mxu0 %v500
  %521 = vmatprep.subr.bf16.mxu0 0
  %522 = vmatpush1.bf16.msra.mxu0 %v501
  %523 = vmatprep.subr.bf16.mxu0 0
  %524 = vmatpush1.bf16.msra.mxu0 %v502
  %525 = vmatprep.subr.bf16.mxu0 0
  %526 = vmatpush1.bf16.msra.mxu0 %v503
  %527 = vmatprep.subr.bf16.mxu0 0
  %528 = vmatpush1.bf16.msra.mxu0 %v504
  %529 = vmatprep.subr.bf16.mxu0 0
  %530 = vmatpush1.bf16.msra.mxu0 0
  %531 = vmatprep.subr.bf16.mxu0 0
  %532 = vmatpush1.bf16.msra.mxu0 0
  %533 = vmatprep.subr.bf16.mxu0 0
  %534 = vmatpush1.bf16.msra.mxu0 0
  %535 = vmatprep.subr.bf16.mxu0 0
  %536 = vmatpush1.bf16.msra.mxu0 0
  %537 = vmatprep.subr.bf16.mxu0 0
  %538 = vmatpush1.bf16.msra.mxu0 0
  %539 = vmatprep.subr.bf16.mxu0 0
  %540 = vmatpush1.bf16.msra.mxu0 0
  %541 = vmatprep.subr.bf16.mxu0 0
  %542 = vmatpush1.bf16.msra.mxu0 0
  %543 = vmatprep.subr.bf16.mxu0 0
  %544 = vmatpush1.bf16.msra.mxu0 0
  %545 = vmatprep.mubr.bf16.mxu0 0
  %546 = vmatmul.mubr.bf16.gmra.mrb[0].mxu0 %v441
  %v547 = vpop.f32.mrb[0].mxu0
  %v548 = vadd.f32 0.0, %v547
  %v549 = vpop.f32.mrb[0].mxu0
  %v550 = vpop.f32.mrb[0].mxu0
  %v551 = vadd.f32 0.0, %v550
  %v552 = vpop.f32.mrb[0].mxu0
  %553 = vmatprep.mubr.bf16.mxu0 0
  %554 = vmatmul.mubr.bf16.gmra.mrb[0].mxu0 %v442
  %v555 = vpop.f32.mrb[0].mxu0
  %v556 = vadd.f32 0.0, %v555
  %v557 = vpop.f32.mrb[0].mxu0
  %v558 = vpop.f32.mrb[0].mxu0
  %v559 = vadd.f32 0.0, %v558
  %v560 = vpop.f32.mrb[0].mxu0
  %561 = vmatprep.mubr.bf16.mxu0 0
  %562 = vmatmul.mubr.bf16.gmra.mrb[0].mxu0 %v443
  %v563 = vpop.f32.mrb[0].mxu0
  %v564 = vadd.f32 0.0, %v563
  %v565 = vpop.f32.mrb[0].mxu0
  %v566 = vpop.f32.mrb[0].mxu0
  %v567 = vadd.f32 0.0, %v566
  %v568 = vpop.f32.mrb[0].mxu0
  %569 = vmatprep.mubr.bf16.mxu0 0
  %570 = vmatmul.mubr.bf16.gmra.mrb[0].mxu0 %v444
  %v571 = vpop.f32.mrb[0].mxu0
  %v572 = vadd.f32 0.0, %v571
  %v573 = vpop.f32.mrb[0].mxu0
  %v574 = vpop.f32.mrb[0].mxu0
  %v575 = vadd.f32 0.0, %v574
  %v576 = vpop.f32.mrb[0].mxu0
  %577 = vmatprep.mubr.bf16.mxu0 0
  %578 = vmatmul.mubr.bf16.gmra.mrb[0].mxu0 %v445
  %v579 = vpop.f32.mrb[0].mxu0
  %v580 = vadd.f32 0.0, %v579
  %v581 = vpop.f32.mrb[0].mxu0
  %v582 = vpop.f32.mrb[0].mxu0
  %v583 = vadd.f32 0.0, %v582
  %v584 = vpop.f32.mrb[0].mxu0
  %585 = vmatprep.mubr.bf16.mxu0 0
  %586 = vmatmul.mubr.bf16.gmra.mrb[0].mxu0 %v446
  %v587 = vpop.f32.mrb[0].mxu0
  %v588 = vadd.f32 0.0, %v587
  %v589 = vpop.f32.mrb[0].mxu0
  %v590 = vpop.f32.mrb[0].mxu0
  %v591 = vadd.f32 0.0, %v590
  %v592 = vpop.f32.mrb[0].mxu0
  %593 = vmatprep.mubr.bf16.mxu0 0
  %594 = vmatmul.mubr.bf16.gmra.mrb[0].mxu0 %v447
  %v595 = vpop.f32.mrb[0].mxu0
  %v596 = vadd.f32 0.0, %v595
  %v597 = vpop.f32.mrb[0].mxu0
  %v598 = vpop.f32.mrb[0].mxu0
  %v599 = vadd.f32 0.0, %v598
  %v600 = vpop.f32.mrb[0].mxu0
  %601 = vmatprep.mubr.bf16.mxu0 0
  %602 = vmatmul.mubr.bf16.gmra.mrb[0].mxu0 %v448
  %v603 = vpop.f32.mrb[0].mxu0
  %v604 = vadd.f32 0.0, %v603
  %v605 = vpop.f32.mrb[0].mxu0
  %v606 = vpop.f32.mrb[0].mxu0
  %v607 = vadd.f32 0.0, %v606
  %v608 = vpop.f32.mrb[0].mxu0
  %609 = vdwg.mxu0
  %v610 = vpack.c.bf16 %v551, %v548
  %v611 = vpack.c.bf16 %v559, %v556
  %v612 = vpack.c.bf16 %v567, %v564
  %v613 = vpack.c.bf16 %v575, %v572
  %v614 = vpack.c.bf16 %v583, %v580
  %v615 = vpack.c.bf16 %v591, %v588
  %v616 = vpack.c.bf16 %v599, %v596
  %v617 = vpack.c.bf16 %v607, %v604
  %v618 = vld [vmem:[%s5] sm:$0x1]
  %v620 = vlaneseq
  %v621 = vshrl.u32 %v620, 7
  %v622 = vsub.s32 0, %v621
  %v623 = vrot.slane %v618, %v622
  %625 = vmatprep.subr.bf16.mxu0 0
  %626 = vmatpush1.bf16.msra.mxu0 %v610
  %627 = vmatprep.subr.bf16.mxu0 0
  %628 = vmatpush1.bf16.msra.mxu0 %v611
  %629 = vmatprep.subr.bf16.mxu0 0
  %630 = vmatpush1.bf16.msra.mxu0 %v612
  %631 = vmatprep.subr.bf16.mxu0 0
  %632 = vmatpush1.bf16.msra.mxu0 %v613
  %633 = vmatprep.subr.bf16.mxu0 0
  %634 = vmatpush1.bf16.msra.mxu0 %v614
  %635 = vmatprep.subr.bf16.mxu0 0
  %636 = vmatpush1.bf16.msra.mxu0 %v615
  %637 = vmatprep.subr.bf16.mxu0 0
  %638 = vmatpush1.bf16.msra.mxu0 %v616
  %639 = vmatprep.subr.bf16.mxu0 0
  %640 = vmatpush1.bf16.msra.mxu0 %v617
  %641 = vmatprep.subr.bf16.mxu0 0
  %642 = vmatpush1.bf16.msra.mxu0 0
  %643 = vmatprep.subr.bf16.mxu0 0
  %644 = vmatpush1.bf16.msra.mxu0 0
  %645 = vmatprep.subr.bf16.mxu0 0
  %646 = vmatpush1.bf16.msra.mxu0 0
  %647 = vmatprep.subr.bf16.mxu0 0
  %648 = vmatpush1.bf16.msra.mxu0 0
  %649 = vmatprep.subr.bf16.mxu0 0
  %650 = vmatpush1.bf16.msra.mxu0 0
  %651 = vmatprep.subr.bf16.mxu0 0
  %652 = vmatpush1.bf16.msra.mxu0 0
  %653 = vmatprep.subr.bf16.mxu0 0
  %654 = vmatpush1.bf16.msra.mxu0 0
  %655 = vmatprep.subr.bf16.mxu0 0
  %656 = vmatpush1.bf16.msra.mxu0 0
  %657 = vmatprep.mubr.bf16.mxu0 0
  %658 = vmatmul.mubr.bf16.gmra.mrb[0].mxu0 %v312
  %v659 = vpop.f32.mrb[0].mxu0
  %v660 = vadd.f32 %v623, %v659
  %v661 = vpop.f32.mrb[0].mxu0
  %v662 = vpop.f32.mrb[0].mxu0
  %v663 = vadd.f32 %v623, %v662
  %v664 = vpop.f32.mrb[0].mxu0
  %665 = vmatprep.mubr.bf16.mxu0 0
  %666 = vmatmul.mubr.bf16.gmra.mrb[0].mxu0 %v313
  %v667 = vpop.f32.mrb[0].mxu0
  %v668 = vadd.f32 %v623, %v667
  %v669 = vpop.f32.mrb[0].mxu0
  %v670 = vpop.f32.mrb[0].mxu0
  %v671 = vadd.f32 %v623, %v670
  %v672 = vpop.f32.mrb[0].mxu0
  %673 = vmatprep.mubr.bf16.mxu0 0
  %674 = vmatmul.mubr.bf16.gmra.mrb[0].mxu0 %v314
  %v675 = vpop.f32.mrb[0].mxu0
  %v676 = vadd.f32 %v623, %v675
  %v677 = vpop.f32.mrb[0].mxu0
  %v678 = vpop.f32.mrb[0].mxu0
  %v679 = vadd.f32 %v623, %v678
  %v680 = vpop.f32.mrb[0].mxu0
  %681 = vmatprep.mubr.bf16.mxu0 0
  %682 = vmatmul.mubr.bf16.gmra.mrb[0].mxu0 %v315
  %v683 = vpop.f32.mrb[0].mxu0
  %v684 = vadd.f32 %v623, %v683
  %v685 = vpop.f32.mrb[0].mxu0
  %v686 = vpop.f32.mrb[0].mxu0
  %v687 = vadd.f32 %v623, %v686
  %v688 = vpop.f32.mrb[0].mxu0
  %689 = vmatprep.mubr.bf16.mxu0 0
  %690 = vmatmul.mubr.bf16.gmra.mrb[0].mxu0 %v316
  %v691 = vpop.f32.mrb[0].mxu0
  %v692 = vadd.f32 %v623, %v691
  %v693 = vpop.f32.mrb[0].mxu0
  %v694 = vpop.f32.mrb[0].mxu0
  %v695 = vadd.f32 %v623, %v694
  %v696 = vpop.f32.mrb[0].mxu0
  %697 = vmatprep.mubr.bf16.mxu0 0
  %698 = vmatmul.mubr.bf16.gmra.mrb[0].mxu0 %v317
  %v699 = vpop.f32.mrb[0].mxu0
  %v700 = vadd.f32 %v623, %v699
  %v701 = vpop.f32.mrb[0].mxu0
  %v702 = vpop.f32.mrb[0].mxu0
  %v703 = vadd.f32 %v623, %v702
  %v704 = vpop.f32.mrb[0].mxu0
  %705 = vmatprep.mubr.bf16.mxu0 0
  %706 = vmatmul.mubr.bf16.gmra.mrb[0].mxu0 %v318
  %v707 = vpop.f32.mrb[0].mxu0
  %v708 = vadd.f32 %v623, %v707
  %v709 = vpop.f32.mrb[0].mxu0
  %v710 = vpop.f32.mrb[0].mxu0
  %v711 = vadd.f32 %v623, %v710
  %v712 = vpop.f32.mrb[0].mxu0
  %713 = vmatprep.mubr.bf16.mxu0 0
  %714 = vmatmul.mubr.bf16.gmra.mrb[0].mxu0 %v319
  %v715 = vpop.f32.mrb[0].mxu0
  %v716 = vadd.f32 %v623, %v715
  %v717 = vpop.f32.mrb[0].mxu0
  %v718 = vpop.f32.mrb[0].mxu0
  %v719 = vadd.f32 %v623, %v718
  %v720 = vpop.f32.mrb[0].mxu0
  %721 = vdwg.mxu0
  %v722 = vmax.f32 %v660, 0.0
  %v723 = vmax.f32 %v663, 0.0
  %v724 = vmax.f32 %v668, 0.0
  %v725 = vmax.f32 %v671, 0.0
  %v726 = vmax.f32 %v676, 0.0
  %v727 = vmax.f32 %v679, 0.0
  %v728 = vmax.f32 %v684, 0.0
  %v729 = vmax.f32 %v687, 0.0
  %v730 = vmax.f32 %v692, 0.0
  %v731 = vmax.f32 %v695, 0.0
  %v732 = vmax.f32 %v700, 0.0
  %v733 = vmax.f32 %v703, 0.0
  %v734 = vmax.f32 %v708, 0.0
  %v735 = vmax.f32 %v711, 0.0
  %v736 = vmax.f32 %v716, 0.0
  %v737 = vmax.f32 %v719, 0.0
  %738 = vst [vmem:[%s6] sm:$0xff] %v722
  %739 = vst [vmem:[%s6 + $0x8] sm:$0xff] %v723
  %740 = vst [vmem:[%s6 + $0x10] sm:$0xff] %v724
  %741 = vst [vmem:[%s6 + $0x18] sm:$0xff] %v725
  %742 = vst [vmem:[%s6 + $0x20] sm:$0xff] %v726
  %743 = vst [vmem:[%s6 + $0x28] sm:$0xff] %v727
  %744 = vst [vmem:[%s6 + $0x30] sm:$0xff] %v728
  %745 = vst [vmem:[%s6 + $0x38] sm:$0xff] %v729
  %746 = vst [vmem:[%s6 + $0x40] sm:$0xff] %v730
  %747 = vst [vmem:[%s6 + $0x48] sm:$0xff] %v731
  %748 = vst [vmem:[%s6 + $0x50] sm:$0xff] %v732
  %749 = vst [vmem:[%s6 + $0x58] sm:$0xff] %v733
  %750 = vst [vmem:[%s6 + $0x60] sm:$0xff] %v734
  %751 = vst [vmem:[%s6 + $0x68] sm:$0xff] %v735
  %752 = vst [vmem:[%s6 + $0x70] sm:$0xff] %v736
  %753 = vst [vmem:[%s6 + $0x78] sm:$0xff] %v737
  // Predicated region
  $region26: #{gcn_model.1} parent=0 // pred_check
    _
  $region27: #{gcn_model.1} parent=0 // pred_check_branch
    %755 = sbr.rel (0) target = $region29
  $region28: #{gcn_model.1} parent=0 // pred_region
    _
  $region29: #{gcn_model.1} parent=0 // pred_fallthru
    _
  // Predicated region
  $region30: #{gcn_model.1} parent=0 // pred_check
    _
  $region31: #{gcn_model.1} parent=0 // pred_check_branch
    %757 = sbr.rel (0) target = $region33
  $region32: #{gcn_model.1} parent=0 // pred_region
    _
  $region33: #{gcn_model.1} parent=0 // pred_fallthru
    _

</llo_original>
